<compile_context>
chip_gen: v7x
topology: tpu7x:2x2x1
jax: 0.10.0
libtpu: 0.0.40
codegen_flags: <defaults>
</compile_context>

<pallas_src>
import jax
import jax.numpy as jnp
from jax.experimental import pallas as pl
from jax.experimental.pallas import tpu as pltpu


def _round_up(x, m):
    return (x + m - 1) // m * m


def _min_pool_kernel(x_ref, mask_ref, o_ref):
    """x_ref: (tb, ts, th); mask_ref: (tb, ts, 1) (S on sublanes, same as x);
    o_ref: (tb, th) resident min-accumulator across the S grid axis."""
    s = pl.program_id(2)

    x = x_ref[...]
    mask = mask_ref[...]                         # (tb, ts, 1) -> lane-splat broadcast
    fill = jnp.asarray(0.0001, dtype=x.dtype)    # torch: embeddings[mask == 0] = 0.0001
    emb = jnp.where(mask == 0, fill, x)
    tile_min = jnp.min(emb, axis=1)              # (tb, th), sublane reduce (XLU)

    @pl.when(s == 0)
    def _():
        o_ref[...] = tile_min

    @pl.when(s > 0)
    def _():
        o_ref[...] = jnp.minimum(o_ref[...], tile_min)


def min_pooling(last_hidden_state, attention_mask, *,
                ts_target=1024, vmem_budget_bytes=40 * 1024 * 1024):
    """Masked min-pool over the sequence dim: [B, S, H], [B, S] -> [B, H]."""
    x = last_hidden_state
    B, S, H = x.shape
    assert attention_mask.shape == (B, S)
    assert jnp.issubdtype(x.dtype, jnp.floating), "MinPooling expects floating hidden states"

    # Mask as (B, S, 1), cast to x.dtype: block layout matches x (S on sublanes).
    mask = attention_mask.reshape(B, S, 1).astype(x.dtype)

    itemsize = jnp.dtype(x.dtype).itemsize

    # ---- batch tile: native sublane height for the dtype (8 f32 / 16 bf16 / 32 int8) ----
    sublane = 8 * max(1, 4 // itemsize)
    if B <= sublane:
        tb, Bp = B, B
    else:
        tb = sublane
        Bp = _round_up(B, tb)
    nb = Bp // tb

    # ---- H tile: prefer full H (contiguous HBM bursts). Split into two lane-aligned
    # tiles only to guarantee >=2 parallel blocks (v7x megacore) when B yields a single
    # block, and only when the split adds zero padding (H % 256 == 0). ----
    th = H
    if nb == 1 and H >= 256 and H % 256 == 0:
        th = H // 2

    def max_ts_for(th_):
        # Double-buffered x tile + lane-padded (tb, ts, 1) mask tile + resident out tile.
        out_bytes = 2 * tb * _round_up(th_, 128) * itemsize
        per_ts = 2 * tb * (th_ * itemsize + 128 * itemsize)
        return max((vmem_budget_bytes - out_bytes) // per_ts, 0)

    ts_cap = max_ts_for(th)
    if ts_cap < 8:
        # H too wide for a full/half-H tile within budget: fall back to lane-tiling H.
        th = 512
        while max_ts_for(th) < 8 and th > 128:
            th //= 2
        ts_cap = max(max_ts_for(th), 8)

    ts = min(ts_target, ts_cap)
    if S <= ts:
        ts, Sp = S, S
    else:
        ts = max((ts // 8) * 8, 8)
        Sp = _round_up(S, ts)

    Hp = H if th == H else _round_up(H, th)

    # ---- min-neutral padding: padded S -> (mask=1, x=+max) can never win the min;
    # padded B/H rows/cols are sliced off after the call. ----
    pad_b, pad_s, pad_h = Bp - B, Sp - S, Hp - H
    if pad_b or pad_s or pad_h:
        x = jnp.pad(x, ((0, pad_b), (0, pad_s), (0, pad_h)),
                    constant_values=jnp.finfo(x.dtype).max)
    if pad_b or pad_s:
        mask = jnp.pad(mask, ((0, pad_b), (0, pad_s), (0, 0)), constant_values=1)

    grid = (Bp // tb, Hp // th, Sp // ts)

    need = (2 * tb * ts * th * itemsize                       # x double buffer
            + 2 * tb * ts * 128 * itemsize                    # mask (lane-padded) buffer
            + 2 * tb * _round_up(th, 128) * itemsize)         # resident output tile
    vmem_limit = int(min(max(need + 8 * 1024 * 1024, 32 * 1024 * 1024),
                         48 * 1024 * 1024))                   # stays inside v7x 64 MiB

    cost = pl.CostEstimate(
        flops=2 * Bp * Sp * Hp,                               # select + min per element
        transcendentals=0,
        bytes_accessed=(Bp * Sp * Hp * itemsize
                        + Bp * Sp * itemsize
                        + Bp * Hp * itemsize),
    )

    out = pl.pallas_call(
        _min_pool_kernel,
        out_shape=jax.ShapeDtypeStruct((Bp, Hp), x.dtype),
        grid=grid,
        in_specs=[
            pl.BlockSpec((tb, ts, th), lambda b, h, s: (b, s, h)),
            pl.BlockSpec((tb, ts, 1), lambda b, h, s: (b, s, 0)),
        ],
        out_specs=pl.BlockSpec((tb, th), lambda b, h, s: (b, h)),
        compiler_params=pltpu.CompilerParams(
            dimension_semantics=("parallel", "parallel", "arbitrary"),
            vmem_limit_bytes=vmem_limit,
        ),
        cost_estimate=cost,
    )(x, mask)

    if pad_b or pad_h:
        out = out[:B, :H]
    return out


def min_pooling_ref(last_hidden_state, attention_mask):
    # Pure-JAX reference mirroring the PyTorch forward.
    emb = jnp.where(attention_mask[..., None] == 0,
                    jnp.asarray(0.0001, last_hidden_state.dtype),
                    last_hidden_state)
    return jnp.min(emb, axis=1)


if __name__ == "__main__":
    key = jax.random.PRNGKey(0)
    k1, k2, k3, k4, k5, k6 = jax.random.split(key, 6)

    # Small shape implied by the module: batch=2, seq=8, hidden=32.
    B, S, H = 2, 8, 32
    x_small = jax.random.normal(k1, (B, S, H), dtype=jnp.float32)
    m_small = (jax.random.uniform(k2, (B, S)) > 0.3).astype(jnp.float32)
    m_small = m_small.at[:, 0].set(1.0)      # at least one valid token per row
    out_small = jax.block_until_ready(min_pooling(x_small, m_small))
    assert out_small.shape == (B, H)
    assert jnp.allclose(out_small, min_pooling_ref(x_small, m_small), atol=1e-6), \
        "small-shape mismatch vs reference"

    # Larger, non-aligned shape: multi-step padded S reduction with a full-H tile.
    B2, S2, H2 = 4, 2500, 384
    x_big = jax.random.normal(k3, (B2, S2, H2), dtype=jnp.float32)
    m_big = (jax.random.uniform(k4, (B2, S2)) > 0.2).astype(jnp.float32)
    m_big = m_big.at[:, 0].set(1.0)
    out_big = jax.block_until_ready(min_pooling(x_big, m_big))
    assert out_big.shape == (B2, H2)
    assert jnp.allclose(out_big, min_pooling_ref(x_big, m_big), atol=1e-6), \
        "tiled-shape mismatch vs reference"

    # bf16 + H % 256 == 0 with a single batch block: exercises the megacore H split.
    B3, S3, H3 = 2, 300, 512
    x_mc = jax.random.normal(k5, (B3, S3, H3), dtype=jnp.bfloat16)
    m_mc = (jax.random.uniform(k6, (B3, S3)) > 0.25).astype(jnp.float32)
    m_mc = m_mc.at[:, 0].set(1.0)
    out_mc = jax.block_until_ready(min_pooling(x_mc, m_mc))
    assert out_mc.shape == (B3, H3)
    assert jnp.allclose(out_mc.astype(jnp.float32),
                        min_pooling_ref(x_mc, m_mc).astype(jnp.float32), atol=1e-6), \
        "megacore-split mismatch vs reference"

    print("KERNEL_OK")
</pallas_src>

<mosaic_0001>
module attributes {stable_mosaic.version = 11 : i64} {
  func.func @_min_pool_kernel(%arg0: i32, %arg1: i32, %arg2: i32, %arg3: memref<2x8x32xf32, #tpu.memory_space<vmem>>, %arg4: memref<2x8x1xf32, #tpu.memory_space<vmem>>, %arg5: memref<2x32xf32, #tpu.memory_space<vmem>>) attributes {dimension_semantics = [#tpu.dimension_semantics<parallel>, #tpu.dimension_semantics<parallel>, #tpu.dimension_semantics<arbitrary>], iteration_bounds = array<i64: 1, 1, 1>, scalar_prefetch = 0 : i64, scratch_operands = 0 : i64, tpu.core_type = #tpu.core_type<tc>, window_params = [{transform_indices = @transform_0, window_bounds = array<i64: 2, 8, 32>}, {transform_indices = @transform_1, window_bounds = array<i64: 2, 8, 1>}, {transform_indices = @transform_2, window_bounds = array<i64: 2, 32>}]} {
    %c0 = arith.constant 0 : index
    %c0_0 = arith.constant 0 : index
    %c0_1 = arith.constant 0 : index
    %0 = vector.load %arg3[%c0, %c0_0, %c0_1] : memref<2x8x32xf32, #tpu.memory_space<vmem>>, vector<2x8x32xf32>
    %c0_2 = arith.constant 0 : index
    %c0_3 = arith.constant 0 : index
    %c0_4 = arith.constant 0 : index
    %1 = vector.load %arg4[%c0_2, %c0_3, %c0_4] : memref<2x8x1xf32, #tpu.memory_space<vmem>>, vector<2x8x1xf32>
    %cst = arith.constant 0.000000e+00 : f32
    %2 = vector.broadcast %cst : f32 to vector<2x8x1xf32>
    %3 = arith.cmpf oeq, %1, %2 : vector<2x8x1xf32>
    %cst_5 = arith.constant 9.99999974E-5 : f32
    %4 = vector.shape_cast %3 : vector<2x8x1xi1> to vector<2x8x1xi1>
    %5 = vector.broadcast %4 : vector<2x8x1xi1> to vector<2x8x32xi1>
    %6 = vector.broadcast %cst_5 : f32 to vector<2x8x32xf32>
    %7 = arith.select %5, %6, %0 : vector<2x8x32xi1>, vector<2x8x32xf32>
    %cst_6 = arith.constant dense<0x7F800000> : vector<2x32xf32>
    %8 = vector.multi_reduction <minimumf>, %7, %cst_6 [1] : vector<2x8x32xf32> to vector<2x32xf32>
    %c0_i32 = arith.constant 0 : i32
    %9 = arith.cmpi eq, %arg2, %c0_i32 : i32
    %10 = arith.extui %9 : i1 to i32
    %c0_i32_7 = arith.constant 0 : i32
    %11 = arith.cmpi ne, %10, %c0_i32_7 : i32
    scf.if %11 {
      %c0_10 = arith.constant 0 : index
      %c0_11 = arith.constant 0 : index
      %15 = vector.load %arg5[%c0_10, %c0_11] : memref<2x32xf32, #tpu.memory_space<vmem>>, vector<2x32xf32>
      tpu.vector_store %arg5[%c0_10, %c0_11], %8 {strides = array<i32>} : memref<2x32xf32, #tpu.memory_space<vmem>>, vector<2x32xf32>,
    } else {
    }
    %c0_i32_8 = arith.constant 0 : i32
    %12 = arith.cmpi sgt, %arg2, %c0_i32_8 : i32
    %13 = arith.extui %12 : i1 to i32
    %c0_i32_9 = arith.constant 0 : i32
    %14 = arith.cmpi ne, %13, %c0_i32_9 : i32
    scf.if %14 {
      %c0_10 = arith.constant 0 : index
      %c0_11 = arith.constant 0 : index
      %15 = vector.load %arg5[%c0_10, %c0_11] : memref<2x32xf32, #tpu.memory_space<vmem>>, vector<2x32xf32>
      %16 = arith.minimumf %15, %8 : vector<2x32xf32>
      %c0_12 = arith.constant 0 : index
      %c0_13 = arith.constant 0 : index
      %17 = vector.load %arg5[%c0_12, %c0_13] : memref<2x32xf32, #tpu.memory_space<vmem>>, vector<2x32xf32>
      tpu.vector_store %arg5[%c0_12, %c0_13], %16 {strides = array<i32>} : memref<2x32xf32, #tpu.memory_space<vmem>>, vector<2x32xf32>,
    } else {
    }
    return
  }
  func.func @transform_0(%arg0: i32, %arg1: i32, %arg2: i32) -> (i32, i32, i32) {
    %c0_i32 = arith.constant 0 : i32
    return %arg0, %arg2, %arg1 : i32, i32, i32
  }
  func.func @transform_1(%arg0: i32, %arg1: i32, %arg2: i32) -> (i32, i32, i32) {
    %c0_i32 = arith.constant 0 : i32
    %c0_i32_0 = arith.constant 0 : i32
    return %arg0, %arg2, %c0_i32 : i32, i32, i32
  }
  func.func @transform_2(%arg0: i32, %arg1: i32, %arg2: i32) -> (i32, i32) {
    %c0_i32 = arith.constant 0 : i32
    return %arg0, %arg1 : i32, i32
  }
}

</mosaic_0001>

<llo_original>
// kernel: tpu_custom_call.1
$region0: #{tpu_custom_call.1}
  #allocation0 [shape = 'u32[]', space=smem, size = 0x4, offset = 0x4, fixed_abs, tag = 'smem constant byte address 0x4 - core index']
  #allocation1 [shape = 'u32[144,128]{1,0:T(1,128)}', space=vmem, size = 0x12000, scoped, tag = 'internal scratch']
  %s0 = inlined_call_operand.vmem [shape: f32[2,8,32], index: 0, kind: input, shape index: {}]
  %s1 = inlined_call_operand.vmem [shape: f32[2,8,1], index: 1, kind: input, shape index: {}]
  %s2 = inlined_call_operand.hbm [shape: f32[2,32], index: 2, kind: output, shape index: {}]
  %s3 = sld [smem:[#allocation0]]
  $region26: #{tpu_custom_call.1} parent=0
    _
  %s5 = ssub.s32 1, %s3
  %s6 = scalar_select 0, %s5, %s3
  $region1: #{tpu_custom_call.1} parent=0
    #allocation2 [shape = 'u8[1024]{0}', space=vmem, size = 0x400, scoped, tag = 'output window, operand 0, single buffered']
    #allocation3 [shape = 's32[1]{0}', space=sflag, size = 0x4, scoped, tag = 'scoped memory for tpu_custom_call.1']
    %7 = vsyncpa [#allocation3], 0
    // Predicated region
    $region2: #{tpu_custom_call.1} parent=1 // pred_check
      _
    $region3: #{tpu_custom_call.1} parent=1 // pred_check_branch
      %9 = sbr.rel (0) target = $region5
    $region4: #{tpu_custom_call.1} parent=1 // pred_region
      _
    $region5: #{tpu_custom_call.1} parent=1 // pred_fallthru
      _
    // Predicated region
    $region6: #{tpu_custom_call.1} parent=1 // pred_check
      _
    $region7: #{tpu_custom_call.1} parent=1 // pred_check_branch
      %11 = sbr.rel (0) target = $region9
    $region8: #{tpu_custom_call.1} parent=1 // pred_region
      _
    $region9: #{tpu_custom_call.1} parent=1 // pred_fallthru
      _
    %v12 = vld [vmem:[%s0] sm:$0xff]
    %v13 = vld [vmem:[%s0 + $0x8] sm:$0xff]
    %v14 = vld [vmem:[%s1] sm:$0xff]
    %v15 = vld [vmem:[%s1 + $0x8] sm:$0xff]
    %vm16 = vcmp.eq.f32.partialorder %v14, 0.0
    %vm17 = vcmp.eq.f32.partialorder %v15, 0.0
    %v18 = vsel %vm16, 1, 0
    %v19 = vsel %vm17, 1, 0
    %20 = vset.pattern.permute.xlu0 0
    %21 = vperm.xlu0 %20, %v18
    %v22 = vpop.permute.xlu0 %21
    %23 = vset.pattern.permute.xlu0 0
    %24 = vperm.xlu0 %23, %v19
    %v25 = vpop.permute.xlu0 %24
    %vm26 = vcmp.eq.s32.totalorder %v22, 1
    %vm27 = vcmp.eq.s32.totalorder %v25, 1
    %v28 = vsel %vm26, 0.0001, %v12
    %v29 = vsel %vm27, 0.0001, %v13
    %vm30 = vcmask 261120
    %v31 = vsel %vm30, %v28, inf
    %v32 = vrot.slane %v31, 4
    %v33 = vmin.f32 %v31, %v32
    %v34 = vrot.slane %v33, 2
    %v35 = vmin.f32 %v33, %v34
    %v36 = vrot.slane %v35, 1
    %v37 = vmin.f32 %v35, %v36
    %v38 = vsel %vm30, %v29, inf
    %v39 = vrot.slane %v38, 4
    %v40 = vmin.f32 %v38, %v39
    %v41 = vrot.slane %v40, 2
    %v42 = vmin.f32 %v40, %v41
    %v43 = vrot.slane %v42, 1
    %v44 = vmin.f32 %v42, %v43
    %p45 = scmp.eq.s32.totalorder 0, 0
    // Predicated region
    $region10: #{tpu_custom_call.1} parent=1 // pred_check
      %p46 = pneg %p45
    $region11: #{tpu_custom_call.1} parent=1 // pred_check_branch
      %48 = sbr.rel (%p46) target = $region13
    $region12: #{tpu_custom_call.1} parent=1 // pred_region
      %vm51 = vcmask 1041409
      %v52 = vsel %vm51, %v44, %v37
      %vm54 = vcmask 254976
      %55 = vst.msk [vmem:[#allocation2] sm:$0x3] %vm54, %v52
    $region13: #{tpu_custom_call.1} parent=1 // pred_fallthru
      _
    %p56 = scmp.gt.s32.totalorder 0, 0
    // Predicated region
    $region14: #{tpu_custom_call.1} parent=1 // pred_check
      %p57 = pneg %p56
    $region15: #{tpu_custom_call.1} parent=1 // pred_check_branch
      %59 = sbr.rel (%p57) target = $region17
    $region16: #{tpu_custom_call.1} parent=1 // pred_region
      %v60 = vld [vmem:[#allocation2] sm:$0x3]
      %vm63 = vcmask 1041409
      %v64 = vsel %vm63, %v44, %v37
      %v66 = vmin.f32 %v60, %v64
      %vm67 = vcmask 254976
      %68 = vst.msk [vmem:[#allocation2] sm:$0x3] %vm67, %v66
    $region17: #{tpu_custom_call.1} parent=1 // pred_fallthru
      _
    // Predicated region
    $region18: #{tpu_custom_call.1} parent=1 // pred_check
      _
    $region19: #{tpu_custom_call.1} parent=1 // pred_check_branch
      %70 = sbr.rel (0) target = $region21
    $region20: #{tpu_custom_call.1} parent=1 // pred_region
      %s72 = ssub.s32 32, 32
      %73 = vsyncadd [#allocation3], %s72
      %s75 = sshll.u32 [#allocation2], 4
      %s76 = int_to_ptr.vmem [resolvable:$true] %s75
      %78 = dma.vmem_to_hbm [thread:$0]  %s76, 32, %s2, [#allocation3]
    $region21: #{tpu_custom_call.1} parent=1 // pred_fallthru
      _
    // Predicated region
    $region22: #{tpu_custom_call.1} parent=1 // pred_check
      _
    $region23: #{tpu_custom_call.1} parent=1 // pred_check_branch
      %80 = sbr.rel (0) target = $region25
    $region24: #{tpu_custom_call.1} parent=1 // pred_region
      %81 = dma.done [#allocation3], 32
    $region25: #{tpu_custom_call.1} parent=1 // pred_fallthru
      _
    %82 = vsyncpa [#allocation3], 1

</llo_original>
